<compile_context>
chip_gen: v5e
topology: v5e:2x2
jax: 0.10.0
libtpu: 0.0.40
codegen_flags: <defaults>
</compile_context>

<pallas_src>
import functools
from typing import NamedTuple

import jax
import jax.numpy as jnp
from jax.experimental import pallas as pl
from jax.experimental.pallas import tpu as pltpu

_LANE = 128
_SUBLANE = 8
# If the whole batch fits in one tile but each half would still have at least
# this many rows, split into two tiles so v7x's 2 TensorCores both get work.
_MIN_TC_SPLIT_ROWS = 1024


def _round_up(n, m):
    return ((n + m - 1) // m) * m


def _cdiv(a, b):
    return (a + b - 1) // b


def _leaky_relu(x, negative_slope=0.01):
    # For 0 < slope < 1, max(x, slope*x) == leaky_relu(x): mul+max (2 VALU ops)
    # instead of the cmp+mul+select that jnp.where lowers to.
    return jnp.maximum(x, negative_slope * x)


def _pad2d(a, shape):
    pads = tuple((0, s - d) for s, d in zip(shape, a.shape))
    return jnp.pad(a, pads) if any(p[1] for p in pads) else a


class PreparedParams(NamedTuple):
    wi: jax.Array
    bi: jax.Array
    wh: jax.Array
    bh: jax.Array
    wo: jax.Array
    bo: jax.Array
    in_n: int
    hid_p: int
    out_n: int
    out_p: int
    compute_dtype: jnp.dtype


def prepare_params(params, compute_dtype=jnp.bfloat16):
    """One-time weight prep (hoisted out of the per-call path).

    PyTorch [out, in] weights -> [in, out], zero-padded so hidden/output feature
    dims are lane-dense (multiples of 128). Matmul inputs cast to compute_dtype
    (bf16 by default, f32 accumulation in-kernel); biases stay f32. Zero padding
    is numerically inert through leaky_relu (f(0) = 0).
    """
    in_n = params["input_w"].shape[1]
    hid = params["input_w"].shape[0]
    out_n = params["output_w"].shape[0]
    hid_p = _round_up(hid, _LANE)
    out_p = _round_up(out_n, _LANE)

    wi = _pad2d(params["input_w"].T, (in_n, hid_p)).astype(compute_dtype)
    wh = _pad2d(params["hidden_w"].T, (hid_p, hid_p)).astype(compute_dtype)
    wo = _pad2d(params["output_w"].T, (hid_p, out_p)).astype(compute_dtype)
    bi = _pad2d(params["input_b"][None, :].astype(jnp.float32), (1, hid_p))
    bh = _pad2d(params["hidden_b"][None, :].astype(jnp.float32), (1, hid_p))
    bo = _pad2d(params["output_b"][None, :].astype(jnp.float32), (1, out_p))
    return PreparedParams(wi, bi, wh, bh, wo, bo, in_n, hid_p, out_n, out_p,
                          jnp.dtype(compute_dtype))


def ann_cc_kernel(x_ref, wi_ref, bi_ref, wh_ref, bh_ref, wo_ref, bo_ref, o_ref,
                  *, compute_dtype, out_n):
    # x tile: (TB, in_n), already in compute_dtype (cast done once in the wrapper).
    x = x_ref[...]

    # Hoist bias/weight reads once (JAX does not CSE broadcast_in_dim).
    bi = bi_ref[...]
    bh = bh_ref[...]
    bo = bo_ref[...]
    wi = wi_ref[...]
    wh = wh_ref[...]
    wo = wo_ref[...]

    # input_layer + leaky_relu (padded to 128 lanes -> fully dense VPU ops)
    h = jnp.dot(x, wi, preferred_element_type=jnp.float32) + bi
    h = _leaky_relu(h)

    # hidden_layer applied three times (shared weights), each with leaky_relu
    for _ in range(3):
        h = jnp.dot(h.astype(compute_dtype), wh,
                    preferred_element_type=jnp.float32) + bh
        h = _leaky_relu(h)

    # output_layer (no activation). Compute against the padded (hid_p, out_p)
    # weights (canonical MXU tiles), but store only the real out_n columns:
    # 16 B/row of HBM writeback instead of a 512 B/row padded f32 slab.
    out = jnp.dot(h.astype(compute_dtype), wo,
                  preferred_element_type=jnp.float32) + bo
    o_ref[...] = out[:, :out_n].astype(o_ref.dtype)


def ann_cc_forward(x, prep: PreparedParams, *, batch_tile=4096):
    """x: [B, in_neuron]. prep: output of prepare_params(). Returns [B, out_n] f32."""
    B = x.shape[0]
    x = x.astype(prep.compute_dtype)          # bf16 by default -> half the x DMA bytes

    tb = min(batch_tile, _round_up(B, _SUBLANE))    # batch tile, multiple of 8
    # v7x: prefer >= 2 batch tiles so the "parallel" axis shards over both TCs.
    if _cdiv(B, tb) < 2 and B >= 2 * _MIN_TC_SPLIT_ROWS:
        tb = _round_up(_cdiv(B, 2), _SUBLANE)
    b_p = _round_up(B, tb)                    # pad batch to whole number of tiles
    if b_p != B:
        x = jnp.pad(x, ((0, b_p - B), (0, 0)))

    grid = (b_p // tb,)

    x_spec = pl.BlockSpec((tb, prep.in_n), lambda i: (i, 0))
    # Narrow, unpadded output: block last dim == full array dim (out_n) -> legal.
    out_spec = pl.BlockSpec((tb, prep.out_n), lambda i: (i, 0))
    # Constant index_map -> weights/biases fetched once, VMEM-resident across steps.
    res = lambda shape: pl.BlockSpec(shape, lambda i: (0, 0))

    w_item = prep.compute_dtype.itemsize
    flops = 2 * b_p * (prep.in_n * prep.hid_p + 3 * prep.hid_p * prep.hid_p
                       + prep.hid_p * prep.out_p)
    bytes_accessed = (
        x.size * x.dtype.itemsize
        + b_p * prep.out_n * 4                       # narrow f32 output
        + (prep.wi.size + prep.wh.size + prep.wo.size) * w_item
        + (prep.bi.size + prep.bh.size + prep.bo.size) * 4
    )

    out = pl.pallas_call(
        functools.partial(ann_cc_kernel, compute_dtype=prep.compute_dtype,
                          out_n=prep.out_n),
        out_shape=jax.ShapeDtypeStruct((b_p, prep.out_n), jnp.float32),
        grid=grid,
        in_specs=[
            x_spec,
            res(prep.wi.shape), res(prep.bi.shape),
            res(prep.wh.shape), res(prep.bh.shape),
            res(prep.wo.shape), res(prep.bo.shape),
        ],
        out_specs=out_spec,
        compiler_params=pltpu.CompilerParams(
            dimension_semantics=("parallel",),   # v7x: shard batch tiles over 2 TCs
        ),
        cost_estimate=pl.CostEstimate(
            flops=flops, transcendentals=0, bytes_accessed=bytes_accessed),
    )(x, prep.wi, prep.bi, prep.wh, prep.bh, prep.wo, prep.bo)

    return out[:B]


def init_params(key, in_neuron, hidden_neuron, out_neuron):
    """Deterministic init mimicking nn.Linear's uniform(-1/sqrt(fan_in), 1/sqrt(fan_in))."""
    ks = jax.random.split(key, 6)

    def linear(kw, kb, fan_in, fan_out):
        bound = 1.0 / jnp.sqrt(jnp.float32(fan_in))
        w = jax.random.uniform(kw, (fan_out, fan_in), jnp.float32, -bound, bound)
        b = jax.random.uniform(kb, (fan_out,), jnp.float32, -bound, bound)
        return w, b

    wi, bi = linear(ks[0], ks[1], in_neuron, hidden_neuron)
    wh, bh = linear(ks[2], ks[3], hidden_neuron, hidden_neuron)
    wo, bo = linear(ks[4], ks[5], hidden_neuron, out_neuron)
    return {
        "input_w": wi, "input_b": bi,
        "hidden_w": wh, "hidden_b": bh,
        "output_w": wo, "output_b": bo,
    }


def reference_forward(x, params):
    """Pure-JAX reference reproducing the PyTorch forward."""
    h = x @ params["input_w"].T + params["input_b"]
    h = _leaky_relu(h)
    for _ in range(3):
        h = h @ params["hidden_w"].T + params["hidden_b"]
        h = _leaky_relu(h)
    return h @ params["output_w"].T + params["output_b"]


if __name__ == "__main__":
    key = jax.random.PRNGKey(0)
    k_param, k_x, k_x2 = jax.random.split(key, 3)

    in_neuron, hidden_neuron, out_neuron = 16, 32, 4
    batch = 8

    params = init_params(k_param, in_neuron, hidden_neuron, out_neuron)
    x = jax.random.normal(k_x, (batch, in_neuron), jnp.float32)
    ref = reference_forward(x, params)

    # f32 compute path: must match the pure-JAX reference tightly.
    prep_f32 = prepare_params(params, compute_dtype=jnp.float32)
    out = jax.block_until_ready(ann_cc_forward(x, prep_f32))
    assert out.shape == (batch, out_neuron)
    assert jnp.allclose(out, ref, atol=1e-5, rtol=1e-5), "f32 mismatch vs reference"

    # Exercise the batch grid + ragged-batch padding (3 grid steps).
    x2 = jax.random.normal(k_x2, (300, in_neuron), jnp.float32)
    ref2 = reference_forward(x2, params)
    out2 = jax.block_until_ready(ann_cc_forward(x2, prep_f32, batch_tile=128))
    assert out2.shape == (300, out_neuron)
    assert jnp.allclose(out2, ref2, atol=1e-5, rtol=1e-5), "gridded f32 mismatch"

    # Default path: bf16 matmul inputs / f32 accumulation (looser tolerance).
    prep_bf16 = prepare_params(params)                     # compute_dtype=bfloat16
    out3 = jax.block_until_ready(ann_cc_forward(x2, prep_bf16, batch_tile=128))
    assert out3.shape == (300, out_neuron)
    assert jnp.allclose(out3, ref2, atol=1e-1, rtol=1e-1), "bf16 mismatch"

    print("KERNEL_OK")
</pallas_src>

<mosaic_0001>
module attributes {stable_mosaic.version = 11 : i64} {
  func.func @ann_cc_kernel(%arg0: i32, %arg1: memref<8x16xf32, #tpu.memory_space<vmem>>, %arg2: memref<16x128xf32, #tpu.memory_space<vmem>>, %arg3: memref<1x128xf32, #tpu.memory_space<vmem>>, %arg4: memref<128x128xf32, #tpu.memory_space<vmem>>, %arg5: memref<1x128xf32, #tpu.memory_space<vmem>>, %arg6: memref<128x128xf32, #tpu.memory_space<vmem>>, %arg7: memref<1x128xf32, #tpu.memory_space<vmem>>, %arg8: memref<8x4xf32, #tpu.memory_space<vmem>>) attributes {dimension_semantics = [#tpu.dimension_semantics<parallel>], iteration_bounds = array<i64: 1>, scalar_prefetch = 0 : i64, scratch_operands = 0 : i64, tpu.core_type = #tpu.core_type<tc>, window_params = [{transform_indices = @transform_0, window_bounds = array<i64: 8, 16>}, {pipeline_mode = #tpu.pipeline_mode<synchronous>, transform_indices = @transform_1, window_bounds = array<i64: 16, 128>}, {pipeline_mode = #tpu.pipeline_mode<synchronous>, transform_indices = @transform_2, window_bounds = array<i64: 1, 128>}, {pipeline_mode = #tpu.pipeline_mode<synchronous>, transform_indices = @transform_3, window_bounds = array<i64: 128, 128>}, {pipeline_mode = #tpu.pipeline_mode<synchronous>, transform_indices = @transform_4, window_bounds = array<i64: 1, 128>}, {pipeline_mode = #tpu.pipeline_mode<synchronous>, transform_indices = @transform_5, window_bounds = array<i64: 128, 128>}, {pipeline_mode = #tpu.pipeline_mode<synchronous>, transform_indices = @transform_6, window_bounds = array<i64: 1, 128>}, {transform_indices = @transform_7, window_bounds = array<i64: 8, 4>}]} {
    %c0 = arith.constant 0 : index
    %c0_0 = arith.constant 0 : index
    %0 = vector.load %arg1[%c0, %c0_0] : memref<8x16xf32, #tpu.memory_space<vmem>>, vector<8x16xf32>
    %c0_1 = arith.constant 0 : index
    %c0_2 = arith.constant 0 : index
    %1 = vector.load %arg3[%c0_1, %c0_2] : memref<1x128xf32, #tpu.memory_space<vmem>>, vector<1x128xf32>
    %c0_3 = arith.constant 0 : index
    %c0_4 = arith.constant 0 : index
    %2 = vector.load %arg5[%c0_3, %c0_4] : memref<1x128xf32, #tpu.memory_space<vmem>>, vector<1x128xf32>
    %c0_5 = arith.constant 0 : index
    %c0_6 = arith.constant 0 : index
    %3 = vector.load %arg7[%c0_5, %c0_6] : memref<1x128xf32, #tpu.memory_space<vmem>>, vector<1x128xf32>
    %c0_7 = arith.constant 0 : index
    %c0_8 = arith.constant 0 : index
    %4 = vector.load %arg2[%c0_7, %c0_8] : memref<16x128xf32, #tpu.memory_space<vmem>>, vector<16x128xf32>
    %c0_9 = arith.constant 0 : index
    %c0_10 = arith.constant 0 : index
    %5 = vector.load %arg4[%c0_9, %c0_10] : memref<128x128xf32, #tpu.memory_space<vmem>>, vector<128x128xf32>
    %c0_11 = arith.constant 0 : index
    %c0_12 = arith.constant 0 : index
    %6 = vector.load %arg6[%c0_11, %c0_12] : memref<128x128xf32, #tpu.memory_space<vmem>>, vector<128x128xf32>
    %cst = arith.constant dense<0.000000e+00> : vector<8x128xf32>
    %7 = tpu.matmul %0, %4, %cst {dimension_numbers = #tpu.dot_dimension_numbers<[1], [0], [0], [1], [0, 0, 1, 1], [], []>} : vector<8x16xf32>, vector<16x128xf32>, vector<8x128xf32> -> vector<8x128xf32>
    %8 = vector.broadcast %1 : vector<1x128xf32> to vector<8x128xf32>
    %9 = arith.addf %7, %8 : vector<8x128xf32>
    %cst_13 = arith.constant 0.00999999977 : f32
    %10 = vector.broadcast %cst_13 : f32 to vector<8x128xf32>
    %11 = arith.mulf %10, %9 : vector<8x128xf32>
    %12 = arith.maximumf %9, %11 : vector<8x128xf32>
    %cst_14 = arith.constant dense<0.000000e+00> : vector<8x128xf32>
    %13 = tpu.matmul %12, %5, %cst_14 {dimension_numbers = #tpu.dot_dimension_numbers<[1], [0], [0], [1], [0, 0, 1, 1], [], []>} : vector<8x128xf32>, vector<128x128xf32>, vector<8x128xf32> -> vector<8x128xf32>
    %14 = vector.broadcast %2 : vector<1x128xf32> to vector<8x128xf32>
    %15 = arith.addf %13, %14 : vector<8x128xf32>
    %cst_15 = arith.constant 0.00999999977 : f32
    %16 = vector.broadcast %cst_15 : f32 to vector<8x128xf32>
    %17 = arith.mulf %16, %15 : vector<8x128xf32>
    %18 = arith.maximumf %15, %17 : vector<8x128xf32>
    %cst_16 = arith.constant dense<0.000000e+00> : vector<8x128xf32>
    %19 = tpu.matmul %18, %5, %cst_16 {dimension_numbers = #tpu.dot_dimension_numbers<[1], [0], [0], [1], [0, 0, 1, 1], [], []>} : vector<8x128xf32>, vector<128x128xf32>, vector<8x128xf32> -> vector<8x128xf32>
    %20 = vector.broadcast %2 : vector<1x128xf32> to vector<8x128xf32>
    %21 = arith.addf %19, %20 : vector<8x128xf32>
    %cst_17 = arith.constant 0.00999999977 : f32
    %22 = vector.broadcast %cst_17 : f32 to vector<8x128xf32>
    %23 = arith.mulf %22, %21 : vector<8x128xf32>
    %24 = arith.maximumf %21, %23 : vector<8x128xf32>
    %cst_18 = arith.constant dense<0.000000e+00> : vector<8x128xf32>
    %25 = tpu.matmul %24, %5, %cst_18 {dimension_numbers = #tpu.dot_dimension_numbers<[1], [0], [0], [1], [0, 0, 1, 1], [], []>} : vector<8x128xf32>, vector<128x128xf32>, vector<8x128xf32> -> vector<8x128xf32>
    %26 = vector.broadcast %2 : vector<1x128xf32> to vector<8x128xf32>
    %27 = arith.addf %25, %26 : vector<8x128xf32>
    %cst_19 = arith.constant 0.00999999977 : f32
    %28 = vector.broadcast %cst_19 : f32 to vector<8x128xf32>
    %29 = arith.mulf %28, %27 : vector<8x128xf32>
    %30 = arith.maximumf %27, %29 : vector<8x128xf32>
    %cst_20 = arith.constant dense<0.000000e+00> : vector<8x128xf32>
    %31 = tpu.matmul %30, %6, %cst_20 {dimension_numbers = #tpu.dot_dimension_numbers<[1], [0], [0], [1], [0, 0, 1, 1], [], []>} : vector<8x128xf32>, vector<128x128xf32>, vector<8x128xf32> -> vector<8x128xf32>
    %32 = vector.broadcast %3 : vector<1x128xf32> to vector<8x128xf32>
    %33 = arith.addf %31, %32 : vector<8x128xf32>
    %34 = vector.extract_strided_slice %33 {offsets = [0, 0], sizes = [8, 4], strides = [1, 1]} : vector<8x128xf32> to vector<8x4xf32>
    %c0_21 = arith.constant 0 : index
    %c0_22 = arith.constant 0 : index
    %35 = vector.load %arg8[%c0_21, %c0_22] : memref<8x4xf32, #tpu.memory_space<vmem>>, vector<8x4xf32>
    tpu.vector_store %arg8[%c0_21, %c0_22], %34 {strides = array<i32>} : memref<8x4xf32, #tpu.memory_space<vmem>>, vector<8x4xf32>,
    return
  }
  func.func @transform_0(%arg0: i32) -> (i32, i32) {
    %c0_i32 = arith.constant 0 : i32
    %c0_i32_0 = arith.constant 0 : i32
    return %arg0, %c0_i32 : i32, i32
  }
  func.func @transform_1(%arg0: i32) -> (i32, i32) {
    %c0_i32 = arith.constant 0 : i32
    %c0_i32_0 = arith.constant 0 : i32
    %c0_i32_1 = arith.constant 0 : i32
    return %c0_i32, %c0_i32_0 : i32, i32
  }
  func.func @transform_2(%arg0: i32) -> (i32, i32) {
    %c0_i32 = arith.constant 0 : i32
    %c0_i32_0 = arith.constant 0 : i32
    %c0_i32_1 = arith.constant 0 : i32
    return %c0_i32, %c0_i32_0 : i32, i32
  }
  func.func @transform_3(%arg0: i32) -> (i32, i32) {
    %c0_i32 = arith.constant 0 : i32
    %c0_i32_0 = arith.constant 0 : i32
    %c0_i32_1 = arith.constant 0 : i32
    return %c0_i32, %c0_i32_0 : i32, i32
  }
  func.func @transform_4(%arg0: i32) -> (i32, i32) {
    %c0_i32 = arith.constant 0 : i32
    %c0_i32_0 = arith.constant 0 : i32
    %c0_i32_1 = arith.constant 0 : i32
    return %c0_i32, %c0_i32_0 : i32, i32
  }
  func.func @transform_5(%arg0: i32) -> (i32, i32) {
    %c0_i32 = arith.constant 0 : i32
    %c0_i32_0 = arith.constant 0 : i32
    %c0_i32_1 = arith.constant 0 : i32
    return %c0_i32, %c0_i32_0 : i32, i32
  }
  func.func @transform_6(%arg0: i32) -> (i32, i32) {
    %c0_i32 = arith.constant 0 : i32
    %c0_i32_0 = arith.constant 0 : i32
    %c0_i32_1 = arith.constant 0 : i32
    return %c0_i32, %c0_i32_0 : i32, i32
  }
  func.func @transform_7(%arg0: i32) -> (i32, i32) {
    %c0_i32 = arith.constant 0 : i32
    %c0_i32_0 = arith.constant 0 : i32
    return %arg0, %c0_i32 : i32, i32
  }
}

</mosaic_0001>

<llo_original>
// kernel: tpu_custom_call.1
$region0: #{tpu_custom_call.1}
  #allocation0 [shape = 'u32[]', space=smem, size = 0x4, offset = 0x4, fixed_abs, tag = 'smem constant byte address 0x4 - core index']
  #allocation1 [shape = 'u32[72,128]{1,0:T(1,128)}', space=vmem, size = 0x9000, scoped, tag = 'internal scratch']
  %s0 = inlined_call_operand.hbm [shape: f32[8,16], index: 0, kind: input, shape index: {}]
  %s1 = inlined_call_operand.hbm [shape: f32[16,128], index: 1, kind: input, shape index: {}]
  %s2 = inlined_call_operand.vmem [shape: f32[1,128], index: 2, kind: input, shape index: {}]
  %s3 = inlined_call_operand.hbm [shape: f32[128,128], index: 3, kind: input, shape index: {}]
  %s4 = inlined_call_operand.vmem [shape: f32[1,128], index: 4, kind: input, shape index: {}]
  %s5 = inlined_call_operand.hbm [shape: f32[128,128], index: 5, kind: input, shape index: {}]
  %s6 = inlined_call_operand.vmem [shape: f32[1,128], index: 6, kind: input, shape index: {}]
  %s7 = inlined_call_operand.vmem [shape: f32[8,4], index: 7, kind: output, shape index: {}]
  %s8 = sld [smem:[#allocation0]]
  $region54: #{tpu_custom_call.1} parent=0
    _
  %s10 = ssub.s32 1, %s8
  %s11 = scalar_select 0, %s10, %s8
  $region1: #{tpu_custom_call.1} parent=0
    #allocation2 [shape = 'u8[4096]{0}', space=vmem, size = 0x1000, scoped, tag = 'input window, operand 0, single buffered']
    #allocation3 [shape = 's32[1]{0}', space=sflag, size = 0x4, scoped, tag = 'scoped memory for tpu_custom_call.1']
    #allocation4 [shape = 'u8[8192]{0}', space=vmem, size = 0x2000, scoped, tag = 'input window, operand 1, single buffered']
    #allocation5 [shape = 's32[1]{0}', space=sflag, size = 0x4, scoped, tag = 'scoped memory for tpu_custom_call.1']
    #allocation6 [shape = 'u8[65536]{0}', space=vmem, size = 0x10000, scoped, tag = 'input window, operand 3, single buffered']
    #allocation7 [shape = 'u8[65536]{0}', space=vmem, size = 0x10000, scoped, tag = 'input window, operand 5, single buffered']
    #allocation8 [shape = 's32[1]{0}', space=sflag, size = 0x4, scoped, tag = 'scoped memory for tpu_custom_call.1']
    %12 = vsyncpa [#allocation3], 0
    %13 = vsyncpa [#allocation5], 0
    %14 = vsyncpa [#allocation8], 0
    // Predicated region
    $region2: #{tpu_custom_call.1} parent=1 // pred_check
      _
    $region3: #{tpu_custom_call.1} parent=1 // pred_check_branch
      %16 = sbr.rel (0) target = $region5
    $region4: #{tpu_custom_call.1} parent=1 // pred_region
      %18 = vsyncadd [#allocation3], 0
      %s20 = sshll.u32 %s0, 4
      %s21 = int_to_ptr.hbm [resolvable:$true] %s20
      %s22 = sshll.u32 [#allocation2], 4
      %s23 = int_to_ptr.vmem [resolvable:$true] %s22
      %25 = dma.hbm_to_vmem [thread:$0]  %s21, 128, %s23, [#allocation3]
    $region5: #{tpu_custom_call.1} parent=1 // pred_fallthru
      _
    // Predicated region
    $region6: #{tpu_custom_call.1} parent=1 // pred_check
      _
    $region7: #{tpu_custom_call.1} parent=1 // pred_check_branch
      %27 = sbr.rel (0) target = $region9
    $region8: #{tpu_custom_call.1} parent=1 // pred_region
      %29 = vsyncadd [#allocation5], 0
      %s30 = sshll.u32 %s1, 4
      %s31 = int_to_ptr.hbm [resolvable:$true] %s30
      %s32 = sshll.u32 [#allocation4], 4
      %s33 = int_to_ptr.vmem [resolvable:$true] %s32
      %38 = dma.hbm_to_vmem [thread:$0]  %s31, 256, %s33, [#allocation5], 128, 128, 8
    $region9: #{tpu_custom_call.1} parent=1 // pred_fallthru
      _
    // Predicated region
    $region10: #{tpu_custom_call.1} parent=1 // pred_check
      _
    $region11: #{tpu_custom_call.1} parent=1 // pred_check_branch
      %40 = sbr.rel (0) target = $region13
    $region12: #{tpu_custom_call.1} parent=1 // pred_region
      _
    $region13: #{tpu_custom_call.1} parent=1 // pred_fallthru
      _
    // Predicated region
    $region14: #{tpu_custom_call.1} parent=1 // pred_check
      _
    $region15: #{tpu_custom_call.1} parent=1 // pred_check_branch
      %42 = sbr.rel (0) target = $region17
    $region16: #{tpu_custom_call.1} parent=1 // pred_region
      %44 = vsyncadd [#allocation5], 0
      %s45 = sshll.u32 %s3, 4
      %s46 = int_to_ptr.hbm [resolvable:$true] %s45
      %s47 = sshll.u32 [#allocation6], 4
      %s48 = int_to_ptr.vmem [resolvable:$true] %s47
      %53 = dma.hbm_to_vmem [thread:$0]  %s46, 2048, %s48, [#allocation5], 128, 128, 8
    $region17: #{tpu_custom_call.1} parent=1 // pred_fallthru
      _
    // Predicated region
    $region18: #{tpu_custom_call.1} parent=1 // pred_check
      _
    $region19: #{tpu_custom_call.1} parent=1 // pred_check_branch
      %55 = sbr.rel (0) target = $region21
    $region20: #{tpu_custom_call.1} parent=1 // pred_region
      _
    $region21: #{tpu_custom_call.1} parent=1 // pred_fallthru
      _
    // Predicated region
    $region22: #{tpu_custom_call.1} parent=1 // pred_check
      _
    $region23: #{tpu_custom_call.1} parent=1 // pred_check_branch
      %57 = sbr.rel (0) target = $region25
    $region24: #{tpu_custom_call.1} parent=1 // pred_region
      %59 = vsyncadd [#allocation8], 0
      %s60 = sshll.u32 %s5, 4
      %s61 = int_to_ptr.hbm [resolvable:$true] %s60
      %s62 = sshll.u32 [#allocation7], 4
      %s63 = int_to_ptr.vmem [resolvable:$true] %s62
      %68 = dma.hbm_to_vmem [thread:$0]  %s61, 2048, %s63, [#allocation8], 128, 128, 8
    $region25: #{tpu_custom_call.1} parent=1 // pred_fallthru
      _
    // Predicated region
    $region26: #{tpu_custom_call.1} parent=1 // pred_check
      _
    $region27: #{tpu_custom_call.1} parent=1 // pred_check_branch
      %70 = sbr.rel (0) target = $region29
    $region28: #{tpu_custom_call.1} parent=1 // pred_region
      _
    $region29: #{tpu_custom_call.1} parent=1 // pred_fallthru
      _
    // Predicated region
    $region30: #{tpu_custom_call.1} parent=1 // pred_check
      _
    $region31: #{tpu_custom_call.1} parent=1 // pred_check_branch
      %72 = sbr.rel (0) target = $region33
    $region32: #{tpu_custom_call.1} parent=1 // pred_region
      %74 = dma.done [#allocation3], 128
    $region33: #{tpu_custom_call.1} parent=1 // pred_fallthru
      _
    // Predicated region
    $region34: #{tpu_custom_call.1} parent=1 // pred_check
      _
    $region35: #{tpu_custom_call.1} parent=1 // pred_check_branch
      %76 = sbr.rel (0) target = $region37
    $region36: #{tpu_custom_call.1} parent=1 // pred_region
      %78 = dma.done [#allocation5], 256
    $region37: #{tpu_custom_call.1} parent=1 // pred_fallthru
      _
    // Predicated region
    $region38: #{tpu_custom_call.1} parent=1 // pred_check
      _
    $region39: #{tpu_custom_call.1} parent=1 // pred_check_branch
      %80 = sbr.rel (0) target = $region41
    $region40: #{tpu_custom_call.1} parent=1 // pred_region
      %82 = dma.done [#allocation5], 2048
    $region41: #{tpu_custom_call.1} parent=1 // pred_fallthru
      _
    // Predicated region
    $region42: #{tpu_custom_call.1} parent=1 // pred_check
      _
    $region43: #{tpu_custom_call.1} parent=1 // pred_check_branch
      %84 = sbr.rel (0) target = $region45
    $region44: #{tpu_custom_call.1} parent=1 // pred_region
      %86 = dma.done [#allocation8], 2048
    $region45: #{tpu_custom_call.1} parent=1 // pred_fallthru
      _
    %v87 = vld [vmem:[#allocation2] sm:$0xff]
    %v88 = vld [vmem:[%s2] sm:$0x1]
    %v89 = vld [vmem:[%s4] sm:$0x1]
    %v90 = vld [vmem:[%s6] sm:$0x1]
    %v91 = vld [vmem:[#allocation4] sm:$0xff]
    %v92 = vld [vmem:[#allocation4 + $0x8] sm:$0xff]
    %v93 = vld [vmem:[#allocation6] sm:$0xff]
    %v94 = vld [vmem:[#allocation6 + $0x8] sm:$0xff]
    %v95 = vld [vmem:[#allocation6 + $0x10] sm:$0xff]
    %v96 = vld [vmem:[#allocation6 + $0x18] sm:$0xff]
    %v97 = vld [vmem:[#allocation6 + $0x20] sm:$0xff]
    %v98 = vld [vmem:[#allocation6 + $0x28] sm:$0xff]
    %v99 = vld [vmem:[#allocation6 + $0x30] sm:$0xff]
    %v100 = vld [vmem:[#allocation6 + $0x38] sm:$0xff]
    %v101 = vld [vmem:[#allocation6 + $0x40] sm:$0xff]
    %v102 = vld [vmem:[#allocation6 + $0x48] sm:$0xff]
    %v103 = vld [vmem:[#allocation6 + $0x50] sm:$0xff]
    %v104 = vld [vmem:[#allocation6 + $0x58] sm:$0xff]
    %v105 = vld [vmem:[#allocation6 + $0x60] sm:$0xff]
    %v106 = vld [vmem:[#allocation6 + $0x68] sm:$0xff]
    %v107 = vld [vmem:[#allocation6 + $0x70] sm:$0xff]
    %v108 = vld [vmem:[#allocation6 + $0x78] sm:$0xff]
    %v109 = vld [vmem:[#allocation7] sm:$0xff]
    %v110 = vld [vmem:[#allocation7 + $0x8] sm:$0xff]
    %v111 = vld [vmem:[#allocation7 + $0x10] sm:$0xff]
    %v112 = vld [vmem:[#allocation7 + $0x18] sm:$0xff]
    %v113 = vld [vmem:[#allocation7 + $0x20] sm:$0xff]
    %v114 = vld [vmem:[#allocation7 + $0x28] sm:$0xff]
    %v115 = vld [vmem:[#allocation7 + $0x30] sm:$0xff]
    %v116 = vld [vmem:[#allocation7 + $0x38] sm:$0xff]
    %v117 = vld [vmem:[#allocation7 + $0x40] sm:$0xff]
    %v118 = vld [vmem:[#allocation7 + $0x48] sm:$0xff]
    %v119 = vld [vmem:[#allocation7 + $0x50] sm:$0xff]
    %v120 = vld [vmem:[#allocation7 + $0x58] sm:$0xff]
    %v121 = vld [vmem:[#allocation7 + $0x60] sm:$0xff]
    %v122 = vld [vmem:[#allocation7 + $0x68] sm:$0xff]
    %v123 = vld [vmem:[#allocation7 + $0x70] sm:$0xff]
    %v124 = vld [vmem:[#allocation7 + $0x78] sm:$0xff]
    %v126 = vperm.slane %v88, 0
    %vm128 = vcmask 130048
    %v130 = vsel %vm128, %v87, 0
    %132 = vmatpush.msra.mxu0 0.0
    %133 = vmatpush.msra.mxu0 0.0
    %134 = vmatpush.msra.mxu0 0.0
    %135 = vmatpush.msra.mxu0 0.0
    %136 = vmatpush.msra.mxu0 0.0
    %137 = vmatpush.msra.mxu0 0.0
    %138 = vmatpush.msra.mxu0 0.0
    %139 = vmatpush.msra.mxu0 0.0
    %140 = vmatpush.msra.mxu0 0.0
    %141 = vmatpush.msra.mxu0 0.0
    %142 = vmatpush.msra.mxu0 0.0
    %143 = vmatpush.msra.mxu0 0.0
    %144 = vmatpush.msra.mxu0 0.0
    %145 = vmatpush.msra.mxu0 0.0
    %146 = vmatpush.msra.mxu0 %v92
    %147 = vmatpush.msra.mxu0 %v91
    %148 = vmatmul.f32.gmra.mxu0 %v130
    %v149 = vpop.f32.mrf.mxu0
    %v150 = vadd.f32 %v126, %v149
    %151 = vdwg.mxu0
    %v152 = vmul.f32 %v150, 0.01
    %v153 = vmax.f32 %v150, %v152
    %v155 = vperm.slane %v89, 0
    %157 = vmatpush.msra.mxu0 %v108
    %158 = vmatpush.msra.mxu0 %v107
    %159 = vmatpush.msra.mxu0 %v106
    %160 = vmatpush.msra.mxu0 %v105
    %161 = vmatpush.msra.mxu0 %v104
    %162 = vmatpush.msra.mxu0 %v103
    %163 = vmatpush.msra.mxu0 %v102
    %164 = vmatpush.msra.mxu0 %v101
    %165 = vmatpush.msra.mxu0 %v100
    %166 = vmatpush.msra.mxu0 %v99
    %167 = vmatpush.msra.mxu0 %v98
    %168 = vmatpush.msra.mxu0 %v97
    %169 = vmatpush.msra.mxu0 %v96
    %170 = vmatpush.msra.mxu0 %v95
    %171 = vmatpush.msra.mxu0 %v94
    %172 = vmatpush.msra.mxu0 %v93
    %173 = vmatmul.f32.gmra.mxu0 %v153
    %v174 = vpop.f32.mrf.mxu0
    %v175 = vadd.f32 %v155, %v174
    %176 = vdwg.mxu0
    %v177 = vmul.f32 %v175, 0.01
    %v178 = vmax.f32 %v175, %v177
    %179 = vmatpush.msra.mxu0 %v108
    %180 = vmatpush.msra.mxu0 %v107
    %181 = vmatpush.msra.mxu0 %v106
    %182 = vmatpush.msra.mxu0 %v105
    %183 = vmatpush.msra.mxu0 %v104
    %184 = vmatpush.msra.mxu0 %v103
    %185 = vmatpush.msra.mxu0 %v102
    %186 = vmatpush.msra.mxu0 %v101
    %187 = vmatpush.msra.mxu0 %v100
    %188 = vmatpush.msra.mxu0 %v99
    %189 = vmatpush.msra.mxu0 %v98
    %190 = vmatpush.msra.mxu0 %v97
    %191 = vmatpush.msra.mxu0 %v96
    %192 = vmatpush.msra.mxu0 %v95
    %193 = vmatpush.msra.mxu0 %v94
    %194 = vmatpush.msra.mxu0 %v93
    %195 = vmatmul.f32.gmra.mxu0 %v178
    %v196 = vpop.f32.mrf.mxu0
    %v197 = vadd.f32 %v155, %v196
    %198 = vdwg.mxu0
    %v199 = vmul.f32 %v197, 0.01
    %v200 = vmax.f32 %v197, %v199
    %201 = vmatpush.msra.mxu0 %v108
    %202 = vmatpush.msra.mxu0 %v107
    %203 = vmatpush.msra.mxu0 %v106
    %204 = vmatpush.msra.mxu0 %v105
    %205 = vmatpush.msra.mxu0 %v104
    %206 = vmatpush.msra.mxu0 %v103
    %207 = vmatpush.msra.mxu0 %v102
    %208 = vmatpush.msra.mxu0 %v101
    %209 = vmatpush.msra.mxu0 %v100
    %210 = vmatpush.msra.mxu0 %v99
    %211 = vmatpush.msra.mxu0 %v98
    %212 = vmatpush.msra.mxu0 %v97
    %213 = vmatpush.msra.mxu0 %v96
    %214 = vmatpush.msra.mxu0 %v95
    %215 = vmatpush.msra.mxu0 %v94
    %216 = vmatpush.msra.mxu0 %v93
    %217 = vmatmul.f32.gmra.mxu0 %v200
    %v218 = vpop.f32.mrf.mxu0
    %v219 = vadd.f32 %v155, %v218
    %220 = vdwg.mxu0
    %v221 = vmul.f32 %v219, 0.01
    %v222 = vmax.f32 %v219, %v221
    %v224 = vperm.slane %v90, 0
    %226 = vmatpush.msra.mxu0 %v124
    %227 = vmatpush.msra.mxu0 %v123
    %228 = vmatpush.msra.mxu0 %v122
    %229 = vmatpush.msra.mxu0 %v121
    %230 = vmatpush.msra.mxu0 %v120
    %231 = vmatpush.msra.mxu0 %v119
    %232 = vmatpush.msra.mxu0 %v118
    %233 = vmatpush.msra.mxu0 %v117
    %234 = vmatpush.msra.mxu0 %v116
    %235 = vmatpush.msra.mxu0 %v115
    %236 = vmatpush.msra.mxu0 %v114
    %237 = vmatpush.msra.mxu0 %v113
    %238 = vmatpush.msra.mxu0 %v112
    %239 = vmatpush.msra.mxu0 %v111
    %240 = vmatpush.msra.mxu0 %v110
    %241 = vmatpush.msra.mxu0 %v109
    %242 = vmatmul.f32.gmra.mxu0 %v222
    %v243 = vpop.f32.mrf.mxu0
    %v244 = vadd.f32 %v224, %v243
    %245 = vdwg.mxu0
    %vm246 = vcmask 31744
    %247 = vst.msk [vmem:[%s7] sm:$0xff] %vm246, %v244
    // Predicated region
    $region46: #{tpu_custom_call.1} parent=1 // pred_check
      _
    $region47: #{tpu_custom_call.1} parent=1 // pred_check_branch
      %249 = sbr.rel (0) target = $region49
    $region48: #{tpu_custom_call.1} parent=1 // pred_region
      _
    $region49: #{tpu_custom_call.1} parent=1 // pred_fallthru
      _
    // Predicated region
    $region50: #{tpu_custom_call.1} parent=1 // pred_check
      _
    $region51: #{tpu_custom_call.1} parent=1 // pred_check_branch
      %251 = sbr.rel (0) target = $region53
    $region52: #{tpu_custom_call.1} parent=1 // pred_region
      _
    $region53: #{tpu_custom_call.1} parent=1 // pred_fallthru
      _
    %252 = vsyncpa [#allocation3], 1
    %253 = vsyncpa [#allocation5], 1
    %254 = vsyncpa [#allocation8], 1

</llo_original>
